<compile_context>
chip_gen: v5e
topology: v5e:2x2
jax: 0.10.0
libtpu: 0.0.40
codegen_flags: <defaults>
</compile_context>

<pallas_src>
import functools

import jax
import jax.numpy as jnp
from jax import lax
from jax.experimental import pallas as pl
from jax.experimental.pallas import tpu as pltpu

_LANE = 128
_SUBLANE = 8
_MAX_BLOCK_B = 4096              # cap on the batch tile (rows)
_VMEM_TARGET_BYTES = 16 << 20    # conservative sizing target: v5e default scoped VMEM


def _round_up(x, m):
    return ((x + m - 1) // m) * m


def prepare_policy_weights(w1, w2, temp=1.0, compute_dtype=jnp.bfloat16,
                           pad_output=False):
    """One-time weight preparation (do NOT call per forward step).

    Args:
      w1: (hid_size, obs_dim) torch fc1.weight, (out, in) layout, no bias.
      w2: (act_dim, hid_size) torch fc2.weight, (out, in) layout, no bias.
      temp: softmax temperature (folded into w2 rows here).
      compute_dtype: matmul input dtype (bf16 recommended; accumulation is f32).
      pad_output: if True, pad the action axis to a multiple of 128 so the
        kernel stores a lane-dense slab (padded probability columns are exact
        zeros).  If False the kernel writes (B, act_dim) directly.

    Returns:
      (w1t, w2t, act_dim): w1t is (obs_dim, hid), w2t is (hid, act_cols).
    """
    hid_size, obs_dim = w1.shape
    act_dim, hid_w = w2.shape
    assert hid_w == hid_size
    w1t = jnp.asarray(w1, jnp.float32).T.astype(compute_dtype)      # (obs, hid)
    w2t = (jnp.asarray(w2, jnp.float32) * (1.0 / float(temp))).T    # (hid, act)
    if pad_output:
        act_cols = _round_up(act_dim, _LANE)
        if act_cols != act_dim:
            w2t = jnp.pad(w2t, ((0, 0), (0, act_cols - act_dim)))
    w2t = w2t.astype(compute_dtype)
    return w1t, w2t, act_dim


def _policy_kernel(x_ref, w1t_ref, w2t_ref, out_ref, *, act_dim, act_cols):
    x = x_ref[...]                                   # (Bt, obs_dim) compute_dtype
    # fc1 + tanh (f32 accumulation / activation math).
    h = jnp.tanh(jnp.dot(x, w1t_ref[...], preferred_element_type=jnp.float32))
    # fc2 (temperature already folded into w2t).
    logits = jnp.dot(h.astype(w2t_ref.dtype), w2t_ref[...],
                     preferred_element_type=jnp.float32)   # (Bt, act_cols) f32
    if act_cols > act_dim:
        # Padded action lanes -> -inf so they contribute exp(-inf) = 0.
        lane = lax.broadcasted_iota(jnp.int32, logits.shape, 1)
        logits = jnp.where(lane < act_dim, logits, -jnp.inf)
    # Numerically stable softmax over the action axis.
    m = jnp.max(logits, axis=1, keepdims=True)
    e = jnp.exp(logits - m)
    denom = jnp.sum(e, axis=1, keepdims=True)
    # Exact reciprocal: denom is (Bt, 1), exactness is free.
    out_ref[...] = (e * pl.reciprocal(denom, approx=False)).astype(out_ref.dtype)


def _choose_block_b(B, obs_dim, act_cols, in_itemsize, weight_bytes):
    """VMEM-budget-driven batch tile, sublane-aligned, >=2 steps when B >= 16."""
    # Per-row VMEM bytes with default double-buffering of the x-tile and out-tile.
    per_row = 2 * (obs_dim * in_itemsize + act_cols * 4)
    budget = _VMEM_TARGET_BYTES - 2 * weight_bytes - (1 << 20)
    block_b = max(_SUBLANE,
                  min(_MAX_BLOCK_B, (budget // per_row) // _SUBLANE * _SUBLANE))
    if B <= block_b:
        if B >= 16:
            # At least 2 grid steps so both v7x TensorCores get work.
            block_b = min(block_b, _round_up(pl.cdiv(B, 2), _SUBLANE))
        else:
            block_b = B   # single full-extent block for tiny batches
    return block_b


def policy_network_forward(x, w1t, w2t, act_dim):
    """Fused PolicyNetwork forward: softmax(tanh(x @ W1) @ W2); temp pre-folded.

    Args:
      x:   (B, obs_dim) observations (cast to the weights' compute dtype).
      w1t: (obs_dim, hid_size) prepared fc1 weight (prepare_policy_weights).
      w2t: (hid_size, act_cols) prepared fc2 weight (temp folded, maybe padded).
      act_dim: true number of actions (columns >= act_dim, if any, come out 0).

    Returns:
      (B, act_cols) float32 action probabilities; valid rows sum to 1.
    """
    B, obs_dim = x.shape
    obs_w, hid_size = w1t.shape
    hid_w, act_cols = w2t.shape
    assert obs_w == obs_dim and hid_w == hid_size and act_cols >= act_dim

    compute_dtype = w1t.dtype
    x = x.astype(compute_dtype)
    in_itemsize = jnp.dtype(compute_dtype).itemsize
    weight_bytes = (w1t.size + w2t.size) * in_itemsize

    block_b = _choose_block_b(B, obs_dim, act_cols, in_itemsize, weight_bytes)
    grid = (pl.cdiv(B, block_b),)

    # Explicit scoped-VMEM limit (v5e defaults to 16 MiB), sized from footprint.
    vmem_need = (2 * weight_bytes
                 + 2 * block_b * (obs_dim * in_itemsize + act_cols * 4)
                 + (1 << 20))
    vmem_limit = int(min(max(2 * vmem_need, 16 << 20), 64 << 20))

    kernel = functools.partial(_policy_kernel, act_dim=act_dim, act_cols=act_cols)

    # TODO(synk): for very large hid_size/obs_dim on v7x (64 MiB VMEM), give the
    # two constant-index weight specs pipeline_mode=pl.Buffered(1) (or DMA them
    # once into scratch) so the constant weights aren't double-buffered.
    return pl.pallas_call(
        kernel,
        out_shape=jax.ShapeDtypeStruct((B, act_cols), jnp.float32),
        grid_spec=pltpu.PrefetchScalarGridSpec(
            num_scalar_prefetch=0,
            grid=grid,
            in_specs=[
                pl.BlockSpec((block_b, obs_dim), lambda i: (i, 0)),
                pl.BlockSpec((obs_dim, hid_size), lambda i: (0, 0)),   # VMEM-resident
                pl.BlockSpec((hid_size, act_cols), lambda i: (0, 0)),  # VMEM-resident
            ],
            out_specs=pl.BlockSpec((block_b, act_cols), lambda i: (i, 0)),
        ),
        compiler_params=pltpu.CompilerParams(
            dimension_semantics=("parallel",),
            vmem_limit_bytes=vmem_limit,
        ),
    )(x, w1t, w2t)


def reference_forward(x, w1, w2, temp=1.0, compute_dtype=jnp.bfloat16):
    """Pure-JAX reference mirroring the kernel's precision choices."""
    xc = x.astype(compute_dtype)
    w1t = w1.T.astype(compute_dtype)
    w2t = ((w2 * (1.0 / float(temp))).T).astype(compute_dtype)
    h = jnp.tanh(jnp.dot(xc, w1t, preferred_element_type=jnp.float32))
    logits = jnp.dot(h.astype(compute_dtype), w2t,
                     preferred_element_type=jnp.float32)
    return jax.nn.softmax(logits, axis=1)


if __name__ == "__main__":
    # Shapes implied by the module: obs_dim = N, hid_size = N, act_dim = N!.
    # N = 4 => obs_dim = 4, hid_size = 4, act_dim = 24; batch = 8.
    N = 4
    obs_dim, hid_size, act_dim = N, N, 24
    batch, temp = 8, 0.5

    key = jax.random.PRNGKey(0)
    kx, k1, k2 = jax.random.split(key, 3)
    x = jax.random.normal(kx, (batch, obs_dim), dtype=jnp.float32)
    # Deterministic synthetic parameters (torch Linear weight shape = (out, in)).
    bound1 = 1.0 / float(jnp.sqrt(obs_dim))
    bound2 = 1.0 / float(jnp.sqrt(hid_size))
    w1 = jax.random.uniform(k1, (hid_size, obs_dim), jnp.float32,
                            minval=-bound1, maxval=bound1)
    w2 = jax.random.uniform(k2, (act_dim, hid_size), jnp.float32,
                            minval=-bound2, maxval=bound2)

    ref = reference_forward(x, w1, w2, temp=temp)

    # Default path: kernel writes (B, act_dim) directly (no pad, no slice).
    w1t, w2t, ad = prepare_policy_weights(w1, w2, temp=temp)
    out = jax.block_until_ready(policy_network_forward(x, w1t, w2t, ad))
    assert out.shape == (batch, act_dim)
    assert jnp.allclose(out, ref, atol=1e-3, rtol=1e-3), "mismatch vs reference"
    assert jnp.allclose(jnp.sum(out, axis=1), 1.0, atol=1e-4), "rows must sum to 1"

    # Lane-dense path: (B, 128) slab; padded probability columns are exact zeros.
    w1t_p, w2t_p, ad_p = prepare_policy_weights(w1, w2, temp=temp, pad_output=True)
    out_p = jax.block_until_ready(policy_network_forward(x, w1t_p, w2t_p, ad_p))
    assert out_p.shape == (batch, _LANE)
    assert jnp.allclose(out_p[:, :act_dim], ref, atol=1e-3, rtol=1e-3)
    assert bool(jnp.all(out_p[:, act_dim:] == 0.0))

    print("KERNEL_OK")
</pallas_src>

<mosaic_0001>
module attributes {stable_mosaic.version = 11 : i64} {
  func.func @_policy_kernel(%arg0: i32, %arg1: memref<8x4xbf16, #tpu.memory_space<vmem>>, %arg2: memref<4x4xbf16, #tpu.memory_space<vmem>>, %arg3: memref<4x24xbf16, #tpu.memory_space<vmem>>, %arg4: memref<8x24xf32, #tpu.memory_space<vmem>>) attributes {dimension_semantics = [#tpu.dimension_semantics<parallel>], iteration_bounds = array<i64: 1>, scalar_prefetch = 0 : i64, scratch_operands = 0 : i64, tpu.core_type = #tpu.core_type<tc>, window_params = [{transform_indices = @transform_0, window_bounds = array<i64: 8, 4>}, {pipeline_mode = #tpu.pipeline_mode<synchronous>, transform_indices = @transform_1, window_bounds = array<i64: 4, 4>}, {pipeline_mode = #tpu.pipeline_mode<synchronous>, transform_indices = @transform_2, window_bounds = array<i64: 4, 24>}, {transform_indices = @transform_3, window_bounds = array<i64: 8, 24>}]} {
    %c0 = arith.constant 0 : index
    %c0_0 = arith.constant 0 : index
    %0 = vector.load %arg1[%c0, %c0_0] : memref<8x4xbf16, #tpu.memory_space<vmem>>, vector<8x4xbf16>
    %c0_1 = arith.constant 0 : index
    %c0_2 = arith.constant 0 : index
    %1 = vector.load %arg2[%c0_1, %c0_2] : memref<4x4xbf16, #tpu.memory_space<vmem>>, vector<4x4xbf16>
    %cst = arith.constant dense<0.000000e+00> : vector<8x4xf32>
    %2 = tpu.matmul %0, %1, %cst {dimension_numbers = #tpu.dot_dimension_numbers<[1], [0], [0], [1], [0, 0, 1, 1], [], []>} : vector<8x4xbf16>, vector<4x4xbf16>, vector<8x4xf32> -> vector<8x4xf32>
    %3 = math.tanh %2 : vector<8x4xf32>
    %4 = arith.truncf %3 : vector<8x4xf32> to vector<8x4xbf16>
    %c0_3 = arith.constant 0 : index
    %c0_4 = arith.constant 0 : index
    %5 = vector.load %arg3[%c0_3, %c0_4] : memref<4x24xbf16, #tpu.memory_space<vmem>>, vector<4x24xbf16>
    %cst_5 = arith.constant dense<0.000000e+00> : vector<8x24xf32>
    %6 = tpu.matmul %4, %5, %cst_5 {dimension_numbers = #tpu.dot_dimension_numbers<[1], [0], [0], [1], [0, 0, 1, 1], [], []>} : vector<8x4xbf16>, vector<4x24xbf16>, vector<8x24xf32> -> vector<8x24xf32>
    %cst_6 = arith.constant dense<0xFF800000> : vector<8xf32>
    %7 = vector.multi_reduction <maximumf>, %6, %cst_6 [1] : vector<8x24xf32> to vector<8xf32>
    %8 = vector.shape_cast %7 : vector<8xf32> to vector<8x1xf32>
    %9 = vector.broadcast %8 : vector<8x1xf32> to vector<8x24xf32>
    %10 = arith.subf %6, %9 : vector<8x24xf32>
    %11 = math.exp %10 : vector<8x24xf32>
    %cst_7 = arith.constant dense<0.000000e+00> : vector<8xf32>
    %12 = vector.multi_reduction <add>, %11, %cst_7 [1] : vector<8x24xf32> to vector<8xf32>
    %13 = vector.shape_cast %12 : vector<8xf32> to vector<8x1xf32>
    %14 = tpu.reciprocal %13 : vector<8x1xf32> -> vector<8x1xf32>
    %15 = vector.broadcast %14 : vector<8x1xf32> to vector<8x24xf32>
    %16 = arith.mulf %11, %15 : vector<8x24xf32>
    %c0_8 = arith.constant 0 : index
    %c0_9 = arith.constant 0 : index
    %17 = vector.load %arg4[%c0_8, %c0_9] : memref<8x24xf32, #tpu.memory_space<vmem>>, vector<8x24xf32>
    tpu.vector_store %arg4[%c0_8, %c0_9], %16 {strides = array<i32>} : memref<8x24xf32, #tpu.memory_space<vmem>>, vector<8x24xf32>,
    return
  }
  func.func @transform_0(%arg0: i32) -> (i32, i32) {
    %c0_i32 = arith.constant 0 : i32
    %c0_i32_0 = arith.constant 0 : i32
    return %arg0, %c0_i32 : i32, i32
  }
  func.func @transform_1(%arg0: i32) -> (i32, i32) {
    %c0_i32 = arith.constant 0 : i32
    %c0_i32_0 = arith.constant 0 : i32
    %c0_i32_1 = arith.constant 0 : i32
    return %c0_i32, %c0_i32_0 : i32, i32
  }
  func.func @transform_2(%arg0: i32) -> (i32, i32) {
    %c0_i32 = arith.constant 0 : i32
    %c0_i32_0 = arith.constant 0 : i32
    %c0_i32_1 = arith.constant 0 : i32
    return %c0_i32, %c0_i32_0 : i32, i32
  }
  func.func @transform_3(%arg0: i32) -> (i32, i32) {
    %c0_i32 = arith.constant 0 : i32
    %c0_i32_0 = arith.constant 0 : i32
    return %arg0, %c0_i32 : i32, i32
  }
}

</mosaic_0001>

<llo_original>
// kernel: tpu_custom_call.1
$region0: #{tpu_custom_call.1}
  #allocation0 [shape = 'u32[]', space=smem, size = 0x4, offset = 0x4, fixed_abs, tag = 'smem constant byte address 0x4 - core index']
  #allocation1 [shape = 'u32[72,128]{1,0:T(1,128)}', space=vmem, size = 0x9000, scoped, tag = 'internal scratch']
  %s0 = inlined_call_operand.vmem [shape: bf16[8,4], index: 0, kind: input, shape index: {}]
  %s1 = inlined_call_operand.vmem [shape: bf16[4,4], index: 1, kind: input, shape index: {}]
  %s2 = inlined_call_operand.vmem [shape: bf16[4,24], index: 2, kind: input, shape index: {}]
  %s3 = inlined_call_operand.hbm [shape: f32[8,24], index: 3, kind: output, shape index: {}]
  %s4 = sld [smem:[#allocation0]]
  $region22: #{tpu_custom_call.1} parent=0
    _
  %s6 = ssub.s32 1, %s4
  %s7 = scalar_select 0, %s6, %s4
  $region1: #{tpu_custom_call.1} parent=0
    #allocation2 [shape = 'u8[4096]{0}', space=vmem, size = 0x1000, scoped, tag = 'output window, operand 0, single buffered']
    #allocation3 [shape = 's32[1]{0}', space=sflag, size = 0x4, scoped, tag = 'scoped memory for tpu_custom_call.1']
    %8 = vsyncpa [#allocation3], 0
    // Predicated region
    $region2: #{tpu_custom_call.1} parent=1 // pred_check
      _
    $region3: #{tpu_custom_call.1} parent=1 // pred_check_branch
      %10 = sbr.rel (0) target = $region5
    $region4: #{tpu_custom_call.1} parent=1 // pred_region
      _
    $region5: #{tpu_custom_call.1} parent=1 // pred_fallthru
      _
    // Predicated region
    $region6: #{tpu_custom_call.1} parent=1 // pred_check
      _
    $region7: #{tpu_custom_call.1} parent=1 // pred_check_branch
      %12 = sbr.rel (0) target = $region9
    $region8: #{tpu_custom_call.1} parent=1 // pred_region
      _
    $region9: #{tpu_custom_call.1} parent=1 // pred_fallthru
      _
    // Predicated region
    $region10: #{tpu_custom_call.1} parent=1 // pred_check
      _
    $region11: #{tpu_custom_call.1} parent=1 // pred_check_branch
      %14 = sbr.rel (0) target = $region13
    $region12: #{tpu_custom_call.1} parent=1 // pred_region
      _
    $region13: #{tpu_custom_call.1} parent=1 // pred_fallthru
      _
    %v16 = vld [vmem:[%s0] sm:$0xf]
    %v17 = vld [vmem:[%s1] sm:$0x3]
    %vm18 = vcmask 31744
    %v20 = vsel %vm18, %v16, 0
    %vm22 = vcmask 1041408
    %v24 = vsel %vm22, %v17, 0
    %26 = vmatpush.bf16.msra.mxu0 0
    %27 = vmatpush.bf16.msra.mxu0 0
    %28 = vmatpush.bf16.msra.mxu0 0
    %29 = vmatpush.bf16.msra.mxu0 0
    %30 = vmatpush.bf16.msra.mxu0 0
    %31 = vmatpush.bf16.msra.mxu0 0
    %32 = vmatpush.bf16.msra.mxu0 0
    %33 = vmatpush.bf16.msra.mxu0 %v24
    %34 = vmatmul.bf16.gmra.mxu0 %v20
    %v35 = vpop.f32.mrf.mxu0
    %v36 = vadd.f32 0.0, %v35
    %v37 = vpop.f32.mrf.mxu0
    %38 = vdwg.mxu0
    %v39 = vtanh.pop %v36
    %v40 = vpack.c.bf16 %v39, %v39
    %v41 = vld [vmem:[%s2] sm:$0x3]
    %v43 = vsel %vm18, %v40, 0
    %v46 = vsel %vm22, %v41, 0
    %48 = vmatpush.bf16.msra.mxu0 0
    %49 = vmatpush.bf16.msra.mxu0 0
    %50 = vmatpush.bf16.msra.mxu0 0
    %51 = vmatpush.bf16.msra.mxu0 0
    %52 = vmatpush.bf16.msra.mxu0 0
    %53 = vmatpush.bf16.msra.mxu0 0
    %54 = vmatpush.bf16.msra.mxu0 0
    %55 = vmatpush.bf16.msra.mxu0 %v46
    %56 = vmatmul.bf16.gmra.mxu0 %v43
    %v57 = vpop.f32.mrf.mxu0
    %v58 = vadd.f32 0.0, %v57
    %v59 = vpop.f32.mrf.mxu0
    %60 = vdwg.mxu0
    %vm61 = vcmask 195584
    %v62 = vsel %vm61, %v58, -inf
    %63 = vmax.xlane.f32.xlu0 %v62
    %v64 = vpop.xlane.xlu0 %63
    %v65 = vsub.f32 %v58, %v64
    %v66 = vmul.f32 %v65, 1.442695
    %v67 = vpow.pop %v66
    %v68 = vsel %vm61, %v67, 0.0
    %69 = vadd.xlane.f32.xlu0 %v68
    %v70 = vpop.xlane.xlu0 %69
    %v71 = vrcp.pop %v70
    %v72 = vmul.f32 %v70, %v71
    %v73 = vsub.f32 1.0, %v72
    %v74 = vmul.f32 %v71, %v73
    %v75 = vadd.f32 %v71, %v74
    %vm76 = vweird.f32 %v70
    %vm77 = vweird.f32 %v71
    %vm78 = vmor %vm76, %vm77
    %v79 = vsel %vm78, %v71, %v75
    %v80 = vand.u32 2147483647, %v70
    %vm81 = vcmp.eq.f32.partialorder %v80, 8.507059e+37
    %v82 = vand.u32 %v70, 2147483648
    %v83 = vor.u32 1.1754944e-38, %v82
    %v84 = vsel %vm81, %v83, %v79
    %v85 = vmul.f32 %v67, %v84
    %86 = vst.msk [vmem:[#allocation2] sm:$0xff] %vm61, %v85
    // Predicated region
    $region14: #{tpu_custom_call.1} parent=1 // pred_check
      _
    $region15: #{tpu_custom_call.1} parent=1 // pred_check_branch
      %88 = sbr.rel (0) target = $region17
    $region16: #{tpu_custom_call.1} parent=1 // pred_region
      %90 = vsyncadd [#allocation3], 0
      %s92 = sshll.u32 [#allocation2], 4
      %s93 = int_to_ptr.vmem [resolvable:$true] %s92
      %s94 = sshll.u32 %s3, 4
      %s95 = int_to_ptr.hbm [resolvable:$true] %s94
      %97 = dma.vmem_to_hbm [thread:$0]  %s93, 128, %s95, [#allocation3]
    $region17: #{tpu_custom_call.1} parent=1 // pred_fallthru
      _
    // Predicated region
    $region18: #{tpu_custom_call.1} parent=1 // pred_check
      _
    $region19: #{tpu_custom_call.1} parent=1 // pred_check_branch
      %99 = sbr.rel (0) target = $region21
    $region20: #{tpu_custom_call.1} parent=1 // pred_region
      %101 = dma.done [#allocation3], 128
    $region21: #{tpu_custom_call.1} parent=1 // pred_fallthru
      _
    %102 = vsyncpa [#allocation3], 1

</llo_original>
